<compile_context>
chip_gen: v5e
topology: v5e:2x2
jax: 0.10.0
libtpu: 0.0.40
codegen_flags: <defaults>
</compile_context>

<pallas_src>
import functools

import jax
import jax.numpy as jnp
from jax.experimental import pallas as pl
from jax.experimental.pallas import tpu as pltpu


def _softplus(x):
    # Matches torch.nn.Softplus(beta=1, threshold=20):
    #   softplus(x) = x                if x > 20
    #               = log(1 + exp(x))  otherwise
    return jnp.where(x > 20.0, x, jnp.log1p(jnp.exp(jnp.minimum(x, 20.0))))


def _mlp_kernel(x_ref, w_ref, b_ref, out_ref, *, dims, approx_sigmoid):
    # x_ref:   (in0, tb)        -- batch on the 128-lane axis (lane-dense)
    # w_ref:   (L, pad_out, pad_in)  packed, zero-padded weight slab (torch (out,in) layout)
    # b_ref:   (L, pad_out, 1)       packed bias slab
    # out_ref: (out_dim, tb)    -- lane-dense output store
    n_layers = len(dims) - 1
    h = x_ref[...]                                   # (in0, tb) f32
    for li in range(n_layers):
        din, dout = dims[li], dims[li + 1]
        w = w_ref[li, :dout, :din]                   # static slice of the slab
        b = b_ref[li, :dout, :]                      # (dout, 1), broadcasts over lanes
        z = jnp.dot(w, h, preferred_element_type=jnp.float32) + b
        if li < n_layers - 1:
            if approx_sigmoid:
                # sigmoid(z) == 0.5*tanh(z/2)+0.5 : single EUP push + cheap VALU.
                h = 0.5 * jnp.tanh(0.5 * z) + 0.5
            else:
                h = 1.0 / (1.0 + jnp.exp(-z))        # exact sigmoid (validation path)
        else:
            h = _softplus(z)                         # final layer: Softplus
    out_ref[...] = h.astype(out_ref.dtype)


def _round_up(n, m):
    return ((n + m - 1) // m) * m


def _choose_tile(B, cap=2048):
    """Pick (tile_b, padded_B).  Lane-axis tiles must be multiples of 128.
    Force >= 2 (even) grid steps when the batch allows, so the "parallel"
    batch axis shards across both v7x TensorCores."""
    pb = _round_up(B, 128)
    n = max(1, -(-pb // cap))          # number of tiles at the cap
    if pb > 128:
        n = max(n, 2)                  # give both TCs work on v7x
        if n % 2:
            n += 1                     # balanced split across 2 cores
    tb = _round_up(-(-pb // n), 128)
    pb = _round_up(pb, tb)
    return tb, pb


def narx18_forward(x, weights, biases, *, tile_cap=2048, approx_sigmoid=True):
    """x: (B, input_size) float32.
    weights[i]: (out_i, in_i) float32 (torch nn.Linear layout).
    biases[i]:  (out_i,) float32.
    Returns (B, output_size) float32."""
    B, in0 = x.shape
    dims = (in0,) + tuple(int(w.shape[0]) for w in weights)
    out_dim = dims[-1]

    tb, pb = _choose_tile(B, tile_cap)
    grid = (pb // tb,)

    # Features on sublanes, batch on lanes (lane-dense activations + stores).
    xt = x.T
    if pb != B:
        xt = jnp.pad(xt, ((0, 0), (0, pb - B)))

    # Pack all layer params into one weight slab + one bias slab (operand
    # count 7 -> 3); zero padding is sliced away inside the kernel.
    pad_out = _round_up(max(dims[1:]), 8)
    pad_in = _round_up(max(dims[:-1]), 8)
    w_slab = jnp.stack([
        jnp.pad(w.astype(jnp.float32),
                ((0, pad_out - w.shape[0]), (0, pad_in - w.shape[1])))
        for w in weights])
    b_slab = jnp.stack([
        jnp.pad(b.astype(jnp.float32).reshape(-1, 1),
                ((0, pad_out - b.shape[0]), (0, 0)))
        for b in biases])

    kernel = functools.partial(_mlp_kernel, dims=dims,
                               approx_sigmoid=approx_sigmoid)

    out_t = pl.pallas_call(
        kernel,
        out_shape=jax.ShapeDtypeStruct((out_dim, pb), jnp.float32),
        grid_spec=pltpu.PrefetchScalarGridSpec(
            num_scalar_prefetch=0,
            grid=grid,
            in_specs=[
                pl.BlockSpec((in0, tb), lambda i: (0, i)),
                pl.BlockSpec(w_slab.shape, lambda i: (0, 0, 0)),
                pl.BlockSpec(b_slab.shape, lambda i: (0, 0, 0)),
            ],
            out_specs=pl.BlockSpec((out_dim, tb), lambda i: (0, i)),
        ),
        compiler_params=pltpu.CompilerParams(
            dimension_semantics=("parallel",),   # batch tiles split across TCs
        ),
    )(xt, w_slab, b_slab)

    out = out_t.T                                 # back to (padded_B, out_dim)
    return out[:B] if pb != B else out


def init_params(key, input_size, hidden_sizes, output_size):
    """Deterministic init mimicking torch.nn.Linear default (uniform +-1/sqrt(fan_in)).
    Returns weights in torch (out, in) layout and biases (out,)."""
    dims = [input_size] + list(hidden_sizes) + [output_size]
    weights, biases = [], []
    for i in range(len(dims) - 1):
        fan_in, fan_out = dims[i], dims[i + 1]
        key, kw, kb = jax.random.split(key, 3)
        bound = 1.0 / jnp.sqrt(jnp.float32(fan_in))
        w = jax.random.uniform(kw, (fan_out, fan_in), jnp.float32, -bound, bound)
        b = jax.random.uniform(kb, (fan_out,), jnp.float32, -bound, bound)
        weights.append(w)
        biases.append(b)
    return weights, biases


def narx18_reference(x, weights, biases):
    h = x
    n = len(weights)
    for i, (w, b) in enumerate(zip(weights, biases)):
        z = h @ w.T + b
        h = (1.0 / (1.0 + jnp.exp(-z))) if i < n - 1 else _softplus(z)
    return h


if __name__ == "__main__":
    # Shapes consistent with the module's forward: x is (batch, input_size).
    input_size = 16
    hidden_sizes = [32, 32]
    output_size = 8
    M = 1.0  # unused in forward (only used in compute_rmse scaling)

    key = jax.random.PRNGKey(0)
    key, kp = jax.random.split(key)
    weights, biases = init_params(kp, input_size, hidden_sizes, output_size)

    # 1) Small, non-multiple-of-128 batch: exercises the pad/slice + transpose
    #    plumbing with the exact sigmoid — matches the plain-JAX reference to 1e-5.
    key, kx = jax.random.split(key)
    x_small = jax.random.normal(kx, (37, input_size), jnp.float32)
    out_small = jax.block_until_ready(
        narx18_forward(x_small, weights, biases, approx_sigmoid=False))
    ref_small = narx18_reference(x_small, weights, biases)
    assert out_small.shape == (37, output_size)
    assert jnp.allclose(out_small, ref_small, atol=1e-5, rtol=1e-5), \
        "mismatch vs reference (exact path)"

    # 2) Larger batch: default fast path (tanh-form sigmoid, 2-step "parallel"
    #    grid so both v7x TensorCores get a tile).  The hardware tanh differs
    #    from 1/(1+exp(-z)) by a few ulps, hence the slightly looser tolerance.
    key, kx = jax.random.split(key)
    x_big = jax.random.normal(kx, (1024, input_size), jnp.float32)
    out_big = jax.block_until_ready(narx18_forward(x_big, weights, biases))
    ref_big = narx18_reference(x_big, weights, biases)
    assert out_big.shape == (1024, output_size)
    assert jnp.allclose(out_big, ref_big, atol=1e-4, rtol=1e-4), \
        "mismatch vs reference (fast path)"

    print("KERNEL_OK")
</pallas_src>

<mosaic_0001>
module attributes {stable_mosaic.version = 11 : i64} {
  func.func @_mlp_kernel(%arg0: i32, %arg1: memref<16x128xf32, #tpu.memory_space<vmem>>, %arg2: memref<3x32x32xf32, #tpu.memory_space<vmem>>, %arg3: memref<3x32x1xf32, #tpu.memory_space<vmem>>, %arg4: memref<8x128xf32, #tpu.memory_space<vmem>>) attributes {dimension_semantics = [#tpu.dimension_semantics<parallel>], iteration_bounds = array<i64: 1>, scalar_prefetch = 0 : i64, scratch_operands = 0 : i64, tpu.core_type = #tpu.core_type<tc>, window_params = [{transform_indices = @transform_0, window_bounds = array<i64: 16, 128>}, {pipeline_mode = #tpu.pipeline_mode<synchronous>, transform_indices = @transform_1, window_bounds = array<i64: 3, 32, 32>}, {pipeline_mode = #tpu.pipeline_mode<synchronous>, transform_indices = @transform_2, window_bounds = array<i64: 3, 32, 1>}, {transform_indices = @transform_3, window_bounds = array<i64: 8, 128>}]} {
    %c0 = arith.constant 0 : index
    %c0_0 = arith.constant 0 : index
    %0 = vector.load %arg1[%c0, %c0_0] : memref<16x128xf32, #tpu.memory_space<vmem>>, vector<16x128xf32>
    %c0_1 = arith.constant 0 : index
    %c0_2 = arith.constant 0 : index
    %c0_3 = arith.constant 0 : index
    %1 = vector.load %arg2[%c0_1, %c0_2, %c0_3] : memref<3x32x32xf32, #tpu.memory_space<vmem>>, vector<1x32x16xf32>
    %2 = vector.shape_cast %1 : vector<1x32x16xf32> to vector<32x16xf32>
    %c0_4 = arith.constant 0 : index
    %c0_5 = arith.constant 0 : index
    %c0_6 = arith.constant 0 : index
    %3 = vector.load %arg3[%c0_4, %c0_5, %c0_6] : memref<3x32x1xf32, #tpu.memory_space<vmem>>, vector<1x32x1xf32>
    %4 = vector.shape_cast %3 : vector<1x32x1xf32> to vector<32x1xf32>
    %cst = arith.constant dense<0.000000e+00> : vector<32x128xf32>
    %5 = tpu.matmul %2, %0, %cst {dimension_numbers = #tpu.dot_dimension_numbers<[1], [0], [0], [1], [0, 0, 1, 1], [], []>} : vector<32x16xf32>, vector<16x128xf32>, vector<32x128xf32> -> vector<32x128xf32>
    %6 = vector.broadcast %4 : vector<32x1xf32> to vector<32x128xf32>
    %7 = arith.addf %5, %6 : vector<32x128xf32>
    %cst_7 = arith.constant 0.000000e+00 : f32
    %8 = vector.broadcast %cst_7 : f32 to vector<32x128xf32>
    %9 = arith.subf %8, %7 : vector<32x128xf32>
    %10 = math.exp %9 : vector<32x128xf32>
    %cst_8 = arith.constant 1.000000e+00 : f32
    %11 = vector.broadcast %cst_8 : f32 to vector<32x128xf32>
    %12 = arith.addf %11, %10 : vector<32x128xf32>
    %cst_9 = arith.constant 1.000000e+00 : f32
    %13 = vector.broadcast %cst_9 : f32 to vector<32x128xf32>
    %14 = arith.divf %13, %12 : vector<32x128xf32>
    %c1 = arith.constant 1 : index
    %c0_10 = arith.constant 0 : index
    %c0_11 = arith.constant 0 : index
    %15 = vector.load %arg2[%c1, %c0_10, %c0_11] : memref<3x32x32xf32, #tpu.memory_space<vmem>>, vector<1x32x32xf32>
    %16 = vector.shape_cast %15 : vector<1x32x32xf32> to vector<32x32xf32>
    %c1_12 = arith.constant 1 : index
    %c0_13 = arith.constant 0 : index
    %c0_14 = arith.constant 0 : index
    %17 = vector.load %arg3[%c1_12, %c0_13, %c0_14] : memref<3x32x1xf32, #tpu.memory_space<vmem>>, vector<1x32x1xf32>
    %18 = vector.shape_cast %17 : vector<1x32x1xf32> to vector<32x1xf32>
    %cst_15 = arith.constant dense<0.000000e+00> : vector<32x128xf32>
    %19 = tpu.matmul %16, %14, %cst_15 {dimension_numbers = #tpu.dot_dimension_numbers<[1], [0], [0], [1], [0, 0, 1, 1], [], []>} : vector<32x32xf32>, vector<32x128xf32>, vector<32x128xf32> -> vector<32x128xf32>
    %20 = vector.broadcast %18 : vector<32x1xf32> to vector<32x128xf32>
    %21 = arith.addf %19, %20 : vector<32x128xf32>
    %cst_16 = arith.constant 0.000000e+00 : f32
    %22 = vector.broadcast %cst_16 : f32 to vector<32x128xf32>
    %23 = arith.subf %22, %21 : vector<32x128xf32>
    %24 = math.exp %23 : vector<32x128xf32>
    %cst_17 = arith.constant 1.000000e+00 : f32
    %25 = vector.broadcast %cst_17 : f32 to vector<32x128xf32>
    %26 = arith.addf %25, %24 : vector<32x128xf32>
    %cst_18 = arith.constant 1.000000e+00 : f32
    %27 = vector.broadcast %cst_18 : f32 to vector<32x128xf32>
    %28 = arith.divf %27, %26 : vector<32x128xf32>
    %c2 = arith.constant 2 : index
    %c0_19 = arith.constant 0 : index
    %c0_20 = arith.constant 0 : index
    %29 = vector.load %arg2[%c2, %c0_19, %c0_20] : memref<3x32x32xf32, #tpu.memory_space<vmem>>, vector<1x8x32xf32>
    %30 = vector.shape_cast %29 : vector<1x8x32xf32> to vector<8x32xf32>
    %c2_21 = arith.constant 2 : index
    %c0_22 = arith.constant 0 : index
    %c0_23 = arith.constant 0 : index
    %31 = vector.load %arg3[%c2_21, %c0_22, %c0_23] : memref<3x32x1xf32, #tpu.memory_space<vmem>>, vector<1x8x1xf32>
    %32 = vector.shape_cast %31 : vector<1x8x1xf32> to vector<8x1xf32>
    %cst_24 = arith.constant dense<0.000000e+00> : vector<8x128xf32>
    %33 = tpu.matmul %30, %28, %cst_24 {dimension_numbers = #tpu.dot_dimension_numbers<[1], [0], [0], [1], [0, 0, 1, 1], [], []>} : vector<8x32xf32>, vector<32x128xf32>, vector<8x128xf32> -> vector<8x128xf32>
    %34 = vector.broadcast %32 : vector<8x1xf32> to vector<8x128xf32>
    %35 = arith.addf %33, %34 : vector<8x128xf32>
    %cst_25 = arith.constant 2.000000e+01 : f32
    %36 = vector.broadcast %cst_25 : f32 to vector<8x128xf32>
    %37 = arith.cmpf ogt, %35, %36 : vector<8x128xf32>
    %cst_26 = arith.constant 2.000000e+01 : f32
    %38 = vector.broadcast %cst_26 : f32 to vector<8x128xf32>
    %39 = arith.minimumf %35, %38 : vector<8x128xf32>
    %40 = math.exp %39 : vector<8x128xf32>
    %41 = math.log1p %40 : vector<8x128xf32>
    %42 = arith.select %37, %35, %41 : vector<8x128xi1>, vector<8x128xf32>
    %c0_27 = arith.constant 0 : index
    %c0_28 = arith.constant 0 : index
    %43 = vector.load %arg4[%c0_27, %c0_28] : memref<8x128xf32, #tpu.memory_space<vmem>>, vector<8x128xf32>
    tpu.vector_store %arg4[%c0_27, %c0_28], %42 {strides = array<i32>} : memref<8x128xf32, #tpu.memory_space<vmem>>, vector<8x128xf32>,
    return
  }
  func.func @transform_0(%arg0: i32) -> (i32, i32) {
    %c0_i32 = arith.constant 0 : i32
    %c0_i32_0 = arith.constant 0 : i32
    return %c0_i32, %arg0 : i32, i32
  }
  func.func @transform_1(%arg0: i32) -> (i32, i32, i32) {
    %c0_i32 = arith.constant 0 : i32
    %c0_i32_0 = arith.constant 0 : i32
    %c0_i32_1 = arith.constant 0 : i32
    %c0_i32_2 = arith.constant 0 : i32
    return %c0_i32, %c0_i32_0, %c0_i32_1 : i32, i32, i32
  }
  func.func @transform_2(%arg0: i32) -> (i32, i32, i32) {
    %c0_i32 = arith.constant 0 : i32
    %c0_i32_0 = arith.constant 0 : i32
    %c0_i32_1 = arith.constant 0 : i32
    %c0_i32_2 = arith.constant 0 : i32
    return %c0_i32, %c0_i32_0, %c0_i32_1 : i32, i32, i32
  }
  func.func @transform_3(%arg0: i32) -> (i32, i32) {
    %c0_i32 = arith.constant 0 : i32
    %c0_i32_0 = arith.constant 0 : i32
    return %c0_i32, %arg0 : i32, i32
  }
}

</mosaic_0001>

<llo_original>
// kernel: tpu_custom_call.1
$region0: #{tpu_custom_call.1}
  #allocation0 [shape = 'u32[]', space=smem, size = 0x4, offset = 0x4, fixed_abs, tag = 'smem constant byte address 0x4 - core index']
  #allocation1 [shape = 'u32[72,128]{1,0:T(1,128)}', space=vmem, size = 0x9000, scoped, tag = 'internal scratch']
  %s0 = inlined_call_operand.hbm [shape: f32[16,128], index: 0, kind: input, shape index: {}]
  %s1 = inlined_call_operand.vmem [shape: f32[3,32,32], index: 1, kind: input, shape index: {}]
  %s2 = inlined_call_operand.vmem [shape: f32[3,32,1], index: 2, kind: input, shape index: {}]
  %s3 = inlined_call_operand.hbm [shape: f32[8,128], index: 3, kind: output, shape index: {}]
  %s4 = sld [smem:[#allocation0]]
  $region26: #{tpu_custom_call.1} parent=0
    _
  %s6 = ssub.s32 1, %s4
  %s7 = scalar_select 0, %s6, %s4
  $region1: #{tpu_custom_call.1} parent=0
    #allocation2 [shape = 'u8[8192]{0}', space=vmem, size = 0x2000, scoped, tag = 'input window, operand 0, single buffered']
    #allocation3 [shape = 's32[1]{0}', space=sflag, size = 0x4, scoped, tag = 'scoped memory for tpu_custom_call.1']
    #allocation4 [shape = 's32[1]{0}', space=sflag, size = 0x4, scoped, tag = 'scoped memory for tpu_custom_call.1']
    #allocation5 [shape = 'u8[4096]{0}', space=vmem, size = 0x1000, scoped, tag = 'output window, operand 0, single buffered']
    %8 = vsyncpa [#allocation3], 0
    %9 = vsyncpa [#allocation4], 0
    // Predicated region
    $region2: #{tpu_custom_call.1} parent=1 // pred_check
      _
    $region3: #{tpu_custom_call.1} parent=1 // pred_check_branch
      %11 = sbr.rel (0) target = $region5
    $region4: #{tpu_custom_call.1} parent=1 // pred_region
      %13 = vsyncadd [#allocation3], 0
      %s14 = sshll.u32 %s0, 4
      %s15 = int_to_ptr.hbm [resolvable:$true] %s14
      %s16 = sshll.u32 [#allocation2], 4
      %s17 = int_to_ptr.vmem [resolvable:$true] %s16
      %22 = dma.hbm_to_vmem [thread:$0]  %s15, 256, %s17, [#allocation3], 128, 128, 8
    $region5: #{tpu_custom_call.1} parent=1 // pred_fallthru
      _
    // Predicated region
    $region6: #{tpu_custom_call.1} parent=1 // pred_check
      _
    $region7: #{tpu_custom_call.1} parent=1 // pred_check_branch
      %24 = sbr.rel (0) target = $region9
    $region8: #{tpu_custom_call.1} parent=1 // pred_region
      _
    $region9: #{tpu_custom_call.1} parent=1 // pred_fallthru
      _
    // Predicated region
    $region10: #{tpu_custom_call.1} parent=1 // pred_check
      _
    $region11: #{tpu_custom_call.1} parent=1 // pred_check_branch
      %26 = sbr.rel (0) target = $region13
    $region12: #{tpu_custom_call.1} parent=1 // pred_region
      _
    $region13: #{tpu_custom_call.1} parent=1 // pred_fallthru
      _
    // Predicated region
    $region14: #{tpu_custom_call.1} parent=1 // pred_check
      _
    $region15: #{tpu_custom_call.1} parent=1 // pred_check_branch
      %28 = sbr.rel (0) target = $region17
    $region16: #{tpu_custom_call.1} parent=1 // pred_region
      %30 = dma.done [#allocation3], 256
    $region17: #{tpu_custom_call.1} parent=1 // pred_fallthru
      _
    %v31 = vld [vmem:[#allocation2] sm:$0xff]
    %v32 = vld [vmem:[#allocation2 + $0x8] sm:$0xff]
    %v33 = vld [vmem:[%s1] sm:$0xff]
    %v34 = vld [vmem:[%s1 + $0x8] sm:$0xff]
    %v35 = vld [vmem:[%s1 + $0x10] sm:$0xff]
    %v36 = vld [vmem:[%s1 + $0x18] sm:$0xff]
    %v37 = vld [vmem:[%s2] sm:$0xff]
    %v38 = vld [vmem:[%s2 + $0x8] sm:$0xff]
    %v39 = vld [vmem:[%s2 + $0x10] sm:$0xff]
    %v40 = vld [vmem:[%s2 + $0x18] sm:$0xff]
    %42 = vset.pattern.permute.xlu0 0
    %43 = vperm.xlu0 %42, %v37
    %v44 = vpop.permute.xlu0 %43
    %47 = vset.pattern.permute.xlu0 0
    %48 = vperm.xlu0 %47, %v38
    %v49 = vpop.permute.xlu0 %48
    %52 = vset.pattern.permute.xlu0 0
    %53 = vperm.xlu0 %52, %v39
    %v54 = vpop.permute.xlu0 %53
    %57 = vset.pattern.permute.xlu0 0
    %58 = vperm.xlu0 %57, %v40
    %v59 = vpop.permute.xlu0 %58
    %vm61 = vcmask 130048
    %v63 = vsel %vm61, %v33, 0
    %v66 = vsel %vm61, %v34, 0
    %v69 = vsel %vm61, %v35, 0
    %v72 = vsel %vm61, %v36, 0
    %74 = vmatpush.msra.mxu0 0.0
    %75 = vmatpush.msra.mxu0 0.0
    %76 = vmatpush.msra.mxu0 0.0
    %77 = vmatpush.msra.mxu0 0.0
    %78 = vmatpush.msra.mxu0 0.0
    %79 = vmatpush.msra.mxu0 0.0
    %80 = vmatpush.msra.mxu0 0.0
    %81 = vmatpush.msra.mxu0 0.0
    %82 = vmatpush.msra.mxu0 0.0
    %83 = vmatpush.msra.mxu0 0.0
    %84 = vmatpush.msra.mxu0 0.0
    %85 = vmatpush.msra.mxu0 0.0
    %86 = vmatpush.msra.mxu0 0.0
    %87 = vmatpush.msra.mxu0 0.0
    %88 = vmatpush.msra.mxu0 %v32
    %89 = vmatpush.msra.mxu0 %v31
    %90 = vmatmul.f32.gmra.mxu0 %v63
    %v91 = vpop.f32.mrf.mxu0
    %v92 = vadd.f32 %v44, %v91
    %93 = vmatmul.f32.gmra.mxu0 %v66
    %v94 = vpop.f32.mrf.mxu0
    %v95 = vadd.f32 %v49, %v94
    %96 = vmatmul.f32.gmra.mxu0 %v69
    %v97 = vpop.f32.mrf.mxu0
    %v98 = vadd.f32 %v54, %v97
    %99 = vmatmul.f32.gmra.mxu0 %v72
    %v100 = vpop.f32.mrf.mxu0
    %v101 = vadd.f32 %v59, %v100
    %102 = vdwg.mxu0
    %v103 = vsub.f32 0.0, %v92
    %v104 = vsub.f32 0.0, %v95
    %v105 = vsub.f32 0.0, %v98
    %v106 = vsub.f32 0.0, %v101
    %v107 = vmul.f32 %v103, 1.442695
    %v108 = vpow.pop %v107
    %v109 = vmul.f32 %v104, 1.442695
    %v110 = vpow.pop %v109
    %v111 = vmul.f32 %v105, 1.442695
    %v112 = vpow.pop %v111
    %v113 = vmul.f32 %v106, 1.442695
    %v114 = vpow.pop %v113
    %v115 = vadd.f32 %v108, 1.0
    %v116 = vadd.f32 %v110, 1.0
    %v117 = vadd.f32 %v112, 1.0
    %v118 = vadd.f32 %v114, 1.0
    %v119 = vrcp.pop %v115
    %v120 = vmul.f32 %v115, %v119
    %v121 = vsub.f32 1.0, %v120
    %v122 = vmul.f32 %v119, %v121
    %v123 = vadd.f32 %v119, %v122
    %vm124 = vweird.f32 %v115
    %vm125 = vweird.f32 %v119
    %vm126 = vmor %vm124, %vm125
    %v127 = vsel %vm126, %v119, %v123
    %v128 = vand.u32 2147483647, %v115
    %vm129 = vcmp.eq.f32.partialorder %v128, 8.507059e+37
    %v130 = vand.u32 %v115, 2147483648
    %v131 = vor.u32 1.1754944e-38, %v130
    %v132 = vsel %vm129, %v131, %v127
    %v133 = vmul.f32 1.0, %v132
    %v134 = vrcp.pop %v116
    %v135 = vmul.f32 %v116, %v134
    %v136 = vsub.f32 1.0, %v135
    %v137 = vmul.f32 %v134, %v136
    %v138 = vadd.f32 %v134, %v137
    %vm139 = vweird.f32 %v116
    %vm140 = vweird.f32 %v134
    %vm141 = vmor %vm139, %vm140
    %v142 = vsel %vm141, %v134, %v138
    %v143 = vand.u32 2147483647, %v116
    %vm144 = vcmp.eq.f32.partialorder %v143, 8.507059e+37
    %v145 = vand.u32 %v116, 2147483648
    %v146 = vor.u32 1.1754944e-38, %v145
    %v147 = vsel %vm144, %v146, %v142
    %v148 = vmul.f32 1.0, %v147
    %v149 = vrcp.pop %v117
    %v150 = vmul.f32 %v117, %v149
    %v151 = vsub.f32 1.0, %v150
    %v152 = vmul.f32 %v149, %v151
    %v153 = vadd.f32 %v149, %v152
    %vm154 = vweird.f32 %v117
    %vm155 = vweird.f32 %v149
    %vm156 = vmor %vm154, %vm155
    %v157 = vsel %vm156, %v149, %v153
    %v158 = vand.u32 2147483647, %v117
    %vm159 = vcmp.eq.f32.partialorder %v158, 8.507059e+37
    %v160 = vand.u32 %v117, 2147483648
    %v161 = vor.u32 1.1754944e-38, %v160
    %v162 = vsel %vm159, %v161, %v157
    %v163 = vmul.f32 1.0, %v162
    %v164 = vrcp.pop %v118
    %v165 = vmul.f32 %v118, %v164
    %v166 = vsub.f32 1.0, %v165
    %v167 = vmul.f32 %v164, %v166
    %v168 = vadd.f32 %v164, %v167
    %vm169 = vweird.f32 %v118
    %vm170 = vweird.f32 %v164
    %vm171 = vmor %vm169, %vm170
    %v172 = vsel %vm171, %v164, %v168
    %v173 = vand.u32 2147483647, %v118
    %vm174 = vcmp.eq.f32.partialorder %v173, 8.507059e+37
    %v175 = vand.u32 %v118, 2147483648
    %v176 = vor.u32 1.1754944e-38, %v175
    %v177 = vsel %vm174, %v176, %v172
    %v178 = vmul.f32 1.0, %v177
    %s179 = scalar_lea.vmem %s1, 32
    %v180 = vld [vmem:[%s179] sm:$0xff]
    %v181 = vld [vmem:[%s179 + $0x8] sm:$0xff]
    %v182 = vld [vmem:[%s179 + $0x10] sm:$0xff]
    %v183 = vld [vmem:[%s179 + $0x18] sm:$0xff]
    %s184 = scalar_lea.vmem %s2, 32
    %v185 = vld [vmem:[%s184] sm:$0xff]
    %v186 = vld [vmem:[%s184 + $0x8] sm:$0xff]
    %v187 = vld [vmem:[%s184 + $0x10] sm:$0xff]
    %v188 = vld [vmem:[%s184 + $0x18] sm:$0xff]
    %190 = vset.pattern.permute.xlu0 0
    %191 = vperm.xlu0 %190, %v185
    %v192 = vpop.permute.xlu0 %191
    %195 = vset.pattern.permute.xlu0 0
    %196 = vperm.xlu0 %195, %v186
    %v197 = vpop.permute.xlu0 %196
    %200 = vset.pattern.permute.xlu0 0
    %201 = vperm.xlu0 %200, %v187
    %v202 = vpop.permute.xlu0 %201
    %205 = vset.pattern.permute.xlu0 0
    %206 = vperm.xlu0 %205, %v188
    %v207 = vpop.permute.xlu0 %206
    %vm209 = vcmask 261120
    %v211 = vsel %vm209, %v180, 0
    %v214 = vsel %vm209, %v181, 0
    %v217 = vsel %vm209, %v182, 0
    %v220 = vsel %vm209, %v183, 0
    %222 = vmatpush.msra.mxu0 0.0
    %223 = vmatpush.msra.mxu0 0.0
    %224 = vmatpush.msra.mxu0 0.0
    %225 = vmatpush.msra.mxu0 0.0
    %226 = vmatpush.msra.mxu0 0.0
    %227 = vmatpush.msra.mxu0 0.0
    %228 = vmatpush.msra.mxu0 0.0
    %229 = vmatpush.msra.mxu0 0.0
    %230 = vmatpush.msra.mxu0 0.0
    %231 = vmatpush.msra.mxu0 0.0
    %232 = vmatpush.msra.mxu0 0.0
    %233 = vmatpush.msra.mxu0 0.0
    %234 = vmatpush.msra.mxu0 %v178
    %235 = vmatpush.msra.mxu0 %v163
    %236 = vmatpush.msra.mxu0 %v148
    %237 = vmatpush.msra.mxu0 %v133
    %238 = vmatmul.f32.gmra.mxu0 %v211
    %v239 = vpop.f32.mrf.mxu0
    %v240 = vadd.f32 %v192, %v239
    %241 = vmatmul.f32.gmra.mxu0 %v214
    %v242 = vpop.f32.mrf.mxu0
    %v243 = vadd.f32 %v197, %v242
    %244 = vmatmul.f32.gmra.mxu0 %v217
    %v245 = vpop.f32.mrf.mxu0
    %v246 = vadd.f32 %v202, %v245
    %247 = vmatmul.f32.gmra.mxu0 %v220
    %v248 = vpop.f32.mrf.mxu0
    %v249 = vadd.f32 %v207, %v248
    %250 = vdwg.mxu0
    %v251 = vsub.f32 0.0, %v240
    %v252 = vsub.f32 0.0, %v243
    %v253 = vsub.f32 0.0, %v246
    %v254 = vsub.f32 0.0, %v249
    %v255 = vmul.f32 %v251, 1.442695
    %v256 = vpow.pop %v255
    %v257 = vmul.f32 %v252, 1.442695
    %v258 = vpow.pop %v257
    %v259 = vmul.f32 %v253, 1.442695
    %v260 = vpow.pop %v259
    %v261 = vmul.f32 %v254, 1.442695
    %v262 = vpow.pop %v261
    %v263 = vadd.f32 %v256, 1.0
    %v264 = vadd.f32 %v258, 1.0
    %v265 = vadd.f32 %v260, 1.0
    %v266 = vadd.f32 %v262, 1.0
    %v267 = vrcp.pop %v263
    %v268 = vmul.f32 %v263, %v267
    %v269 = vsub.f32 1.0, %v268
    %v270 = vmul.f32 %v267, %v269
    %v271 = vadd.f32 %v267, %v270
    %vm272 = vweird.f32 %v263
    %vm273 = vweird.f32 %v267
    %vm274 = vmor %vm272, %vm273
    %v275 = vsel %vm274, %v267, %v271
    %v276 = vand.u32 2147483647, %v263
    %vm277 = vcmp.eq.f32.partialorder %v276, 8.507059e+37
    %v278 = vand.u32 %v263, 2147483648
    %v279 = vor.u32 1.1754944e-38, %v278
    %v280 = vsel %vm277, %v279, %v275
    %v281 = vmul.f32 1.0, %v280
    %v282 = vrcp.pop %v264
    %v283 = vmul.f32 %v264, %v282
    %v284 = vsub.f32 1.0, %v283
    %v285 = vmul.f32 %v282, %v284
    %v286 = vadd.f32 %v282, %v285
    %vm287 = vweird.f32 %v264
    %vm288 = vweird.f32 %v282
    %vm289 = vmor %vm287, %vm288
    %v290 = vsel %vm289, %v282, %v286
    %v291 = vand.u32 2147483647, %v264
    %vm292 = vcmp.eq.f32.partialorder %v291, 8.507059e+37
    %v293 = vand.u32 %v264, 2147483648
    %v294 = vor.u32 1.1754944e-38, %v293
    %v295 = vsel %vm292, %v294, %v290
    %v296 = vmul.f32 1.0, %v295
    %v297 = vrcp.pop %v265
    %v298 = vmul.f32 %v265, %v297
    %v299 = vsub.f32 1.0, %v298
    %v300 = vmul.f32 %v297, %v299
    %v301 = vadd.f32 %v297, %v300
    %vm302 = vweird.f32 %v265
    %vm303 = vweird.f32 %v297
    %vm304 = vmor %vm302, %vm303
    %v305 = vsel %vm304, %v297, %v301
    %v306 = vand.u32 2147483647, %v265
    %vm307 = vcmp.eq.f32.partialorder %v306, 8.507059e+37
    %v308 = vand.u32 %v265, 2147483648
    %v309 = vor.u32 1.1754944e-38, %v308
    %v310 = vsel %vm307, %v309, %v305
    %v311 = vmul.f32 1.0, %v310
    %v312 = vrcp.pop %v266
    %v313 = vmul.f32 %v266, %v312
    %v314 = vsub.f32 1.0, %v313
    %v315 = vmul.f32 %v312, %v314
    %v316 = vadd.f32 %v312, %v315
    %vm317 = vweird.f32 %v266
    %vm318 = vweird.f32 %v312
    %vm319 = vmor %vm317, %vm318
    %v320 = vsel %vm319, %v312, %v316
    %v321 = vand.u32 2147483647, %v266
    %vm322 = vcmp.eq.f32.partialorder %v321, 8.507059e+37
    %v323 = vand.u32 %v266, 2147483648
    %v324 = vor.u32 1.1754944e-38, %v323
    %v325 = vsel %vm322, %v324, %v320
    %v326 = vmul.f32 1.0, %v325
    %s327 = scalar_lea.vmem %s1, 64
    %v328 = vld [vmem:[%s327] sm:$0xff]
    %s329 = scalar_lea.vmem %s2, 64
    %v330 = vld [vmem:[%s329] sm:$0xff]
    %332 = vset.pattern.permute.xlu0 0
    %333 = vperm.xlu0 %332, %v330
    %v334 = vpop.permute.xlu0 %333
    %v337 = vsel %vm209, %v328, 0
    %339 = vmatpush.msra.mxu0 0.0
    %340 = vmatpush.msra.mxu0 0.0
    %341 = vmatpush.msra.mxu0 0.0
    %342 = vmatpush.msra.mxu0 0.0
    %343 = vmatpush.msra.mxu0 0.0
    %344 = vmatpush.msra.mxu0 0.0
    %345 = vmatpush.msra.mxu0 0.0
    %346 = vmatpush.msra.mxu0 0.0
    %347 = vmatpush.msra.mxu0 0.0
    %348 = vmatpush.msra.mxu0 0.0
    %349 = vmatpush.msra.mxu0 0.0
    %350 = vmatpush.msra.mxu0 0.0
    %351 = vmatpush.msra.mxu0 %v326
    %352 = vmatpush.msra.mxu0 %v311
    %353 = vmatpush.msra.mxu0 %v296
    %354 = vmatpush.msra.mxu0 %v281
    %355 = vmatmul.f32.gmra.mxu0 %v337
    %v356 = vpop.f32.mrf.mxu0
    %v357 = vadd.f32 %v334, %v356
    %358 = vdwg.mxu0
    %vm359 = vcmp.gt.f32.partialorder %v357, 20.0
    %v360 = vmin.f32 %v357, 20.0
    %v361 = vmul.f32 %v360, 1.442695
    %v362 = vpow.pop %v361
    %v363 = vadd.f32 %v362, 1.0
    %v364 = vlog2.pop %v363
    %v365 = vmul.f32 %v364, 0.6931472
    %v366 = vmul.f32 -0.5, %v362
    %v367 = vadd.f32 %v366, 1.0
    %v368 = vmul.f32 %v367, %v362
    %v369 = vand.u32 2147483647, %v362
    %vm370 = vcmp.lt.f32.partialorder %v369, 0.0004427343
    %v371 = vsel %vm370, %v368, %v365
    %v372 = vsel %vm359, %v357, %v371
    %373 = vst [vmem:[#allocation5] sm:$0xff] %v372
    // Predicated region
    $region18: #{tpu_custom_call.1} parent=1 // pred_check
      _
    $region19: #{tpu_custom_call.1} parent=1 // pred_check_branch
      %375 = sbr.rel (0) target = $region21
    $region20: #{tpu_custom_call.1} parent=1 // pred_region
      %377 = vsyncadd [#allocation4], 0
      %s379 = sshll.u32 [#allocation5], 4
      %s380 = int_to_ptr.vmem [resolvable:$true] %s379
      %s381 = sshll.u32 %s3, 4
      %s382 = int_to_ptr.hbm [resolvable:$true] %s381
      %384 = dma.vmem_to_hbm [thread:$0]  %s380, 128, %s382, [#allocation4]
    $region21: #{tpu_custom_call.1} parent=1 // pred_fallthru
      _
    // Predicated region
    $region22: #{tpu_custom_call.1} parent=1 // pred_check
      _
    $region23: #{tpu_custom_call.1} parent=1 // pred_check_branch
      %386 = sbr.rel (0) target = $region25
    $region24: #{tpu_custom_call.1} parent=1 // pred_region
      %388 = dma.done [#allocation4], 128
    $region25: #{tpu_custom_call.1} parent=1 // pred_fallthru
      _
    %389 = vsyncpa [#allocation3], 1
    %390 = vsyncpa [#allocation4], 1

</llo_original>
